<compile_context>
chip_gen: v5e
topology: v5e:2x2
jax: 0.10.0
libtpu: 0.0.40
codegen_flags: <defaults>
</compile_context>

<pallas_src>
import functools

import jax
import jax.numpy as jnp
from jax.experimental import pallas as pl
from jax.experimental.pallas import tpu as pltpu


def _round_up(a, b):
    return ((a + b - 1) // b) * b


def _vmem_plan():
    """(vmem_limit_bytes for the compiler, planning budget with headroom)."""
    cap = None
    try:
        cap = getattr(pltpu.get_tpu_info(), "vmem_capacity_bytes", None)
    except Exception:
        cap = None
    if not cap:
        cap = 64 * 1024 * 1024            # conservative fallback (v7x physical VMEM)
    limit = int(cap * 0.8)                # ~102 MiB on v5e/v6e, ~51 MiB on v7x
    return limit, int(limit * 0.85)       # plan tiles with extra headroom


def _plan_tiles(n, c, l_latent, f_pad, adj_bytes, itm_bytes, budget):
    """Pick (tm, tk, n_pad_rows, n_pad_cols) so both passes fit the VMEM budget.

    Prefers the largest adj block (amortizes ~0.35us/step, keeps DMA deep);
    tk == full width additionally keeps rhs resident across row blocks.  Column
    padding is capped at ~10% so K-tiling never inflates adj HBM traffic much.
    """
    f32b = 4
    n8 = _round_up(max(n, 1), 8)
    c_pad = _round_up(c, 128)
    wide_pad = f_pad + _round_up(l_latent, 128)
    w_bytes = 2 * f32b * (c * wide_pad + wide_pad + l_latent * c_pad + 2 * c_pad)

    tm_opts = [t for t in (512, 256, 128, 64, 32, 16, 8) if t <= n8] or [8]
    best = None
    for tm in tm_opts:
        n_pad_r = _round_up(n, tm)
        for tk_opt in ("FULL", 8192, 4096, 2048, 1024, 512, 256, 128):
            if tk_opt == "FULL":
                tk, n_pad_c = n_pad_r, n_pad_r
            else:
                if tk_opt >= n8:
                    continue                           # "FULL" already covers this
                tk = tk_opt
                n_pad_c = _round_up(n, tk)
                if (n_pad_c - n) * 10 > n:             # >10% column padding: skip
                    continue
            apply_b = (2 * tm * tk * adj_bytes          # adj block (double-buffered)
                       + 2 * tk * f_pad * itm_bytes     # rhs K-block
                       + 2 * tm * f_pad * itm_bytes     # target row block
                       + 2 * tm * f_pad * f32b          # out row block
                       + tm * f_pad * f32b)             # f32 accumulator scratch
            prep_b = (2 * tm * tk * adj_bytes           # adj block
                      + 2 * tm * c_pad * f32b           # x row block
                      + 4 * tm * f_pad * itm_bytes      # target + rhs outputs
                      + tm * 128 * f32b                 # q scratch
                      + w_bytes)                        # small resident weights
            if max(apply_b, prep_b) > budget:
                continue
            score = (tm * tk, tk)
            if best is None or score > best[0]:
                best = (score, tm, tk, n_pad_r, n_pad_c)
    if best is None:                                    # minimal fallback
        tm = 8
        tk = 128 if n8 > 128 else n8
        return tm, tk, _round_up(n, tm), _round_up(n, tk)
    return best[1], best[2], best[3], best[4]


# --------------------------------------------------------------------------------------
# Pass 1: stream adj (tm, tk) blocks accumulating q = adj.sum(-1); at the last K
# block run the small MLPs and emit
#   target (tm, Fp) = relu(f(x))                 (lane-padded)
#   rhs    (tm, Fp) = [ s*target | s | 0-pad ]   (s placed in column f_col)
# --------------------------------------------------------------------------------------
def tmd_prep_kernel(nrows_ref, bpi2_ref, adj_ref, x_ref, wcat_ref, bcat_ref,
                    wpi1_ref, bpi1_ref, wpi2t_ref, target_ref, rhs_ref,
                    q_acc, *, tm, f_pad, f_col):
    i = pl.program_id(0)
    k = pl.program_id(1)

    @pl.when(k == 0)
    def _():
        q_acc[...] = jnp.zeros_like(q_acc)

    # partial row sums of the streamed adj column-block (q_epsilon_tilde)
    q_acc[...] += jnp.sum(adj_ref[...].astype(jnp.float32), axis=1, keepdims=True)

    @pl.when(k == pl.num_programs(1) - 1)
    def _():
        x = x_ref[...].astype(jnp.float32)                          # (tm, C)
        # fused x @ [wf_pad | wproj] : one MXU pass over x
        cat = jnp.dot(x, wcat_ref[...],
                      preferred_element_type=jnp.float32) + bcat_ref[...]
        target = jnp.maximum(cat[:, :f_pad], 0.0)    # relu(f(x)); padded cols exactly 0
        xp = cat[:, f_pad:]                          # proj_list(x), (tm, L_latent)

        # pi_list: Linear(L->C) -> ReLU -> Linear(C->1) -> Sigmoid
        h = jnp.dot(xp, wpi1_ref[...],
                    preferred_element_type=jnp.float32) + bpi1_ref[...]
        h = jnp.maximum(h, 0.0)
        # width-1 head as a lane reduce (avoids a 1-lane MXU output / masked stores)
        logit = jnp.sum(h * wpi2t_ref[...], axis=1, keepdims=True) + bpi2_ref[0]
        pi = jax.nn.sigmoid(logit)                                   # (tm, 1)

        # s = pi / q, zeroed on padded rows (q == 0 there) BEFORE any multiply so
        # padded rows cannot contaminate the column reduction of the apply matmul.
        row = i * tm + jax.lax.broadcasted_iota(jnp.int32, (tm, 1), 0)
        valid = row < nrows_ref[0]
        s = jnp.where(valid, pi / q_acc[...], 0.0)

        col = jax.lax.broadcasted_iota(jnp.int32, (tm, f_pad), 1)
        rhs = jnp.where(col == f_col, s, s * target)                 # [s*target | s | 0]
        target_ref[...] = target.astype(target_ref.dtype)
        rhs_ref[...] = rhs.astype(rhs_ref.dtype)


# --------------------------------------------------------------------------------------
# Pass 2: K-tiled adj-streaming matmul.
#   acc  = sum_k adj_block(i,k) @ rhs_block(k)         (f32 accumulator)
#   d~   = acc[:, f_col] + 1e-5
#   out  = (1-dt)*target + (dt/eps) * acc / d~          (column reciprocal epilogue)
# --------------------------------------------------------------------------------------
def tmd_apply_kernel(coef_ref, adj_ref, rhs_ref, target_ref, out_ref, acc_ref,
                     *, f_col):
    k = pl.program_id(1)

    @pl.when(k == 0)
    def _():
        acc_ref[...] = jnp.zeros_like(acc_ref)

    acc_ref[...] += jnp.dot(adj_ref[...], rhs_ref[...],
                            preferred_element_type=jnp.float32)

    @pl.when(k == pl.num_programs(1) - 1)
    def _():
        y = acc_ref[...]                                             # (tm, Fp)
        d = y[:, f_col:f_col + 1] + 1e-5                             # (tm, 1)
        inv = coef_ref[1] * pl.reciprocal(d)                         # column-wise only
        out = coef_ref[0] * target_ref[...].astype(jnp.float32) + y * inv
        out_ref[...] = out.astype(out_ref.dtype)


def tmd_layer_pallas(x, adj, params, *, epsilon=0.25, adj_compute_dtype=jnp.bfloat16):
    """x: (N, C) float32, adj: (1, N, N) (torch bmm layout).

    adj_compute_dtype is used for the streamed adjacency AND the inter-pass
    intermediates (target / rhs).  Both passes are HBM-bound on adj, so the
    bf16 default roughly halves wall time on every TPU generation (MXU still
    accumulates in f32).  Pass jnp.float32 for a torch-exact path; pass adj
    already in the compute dtype to skip the one-time host-side cast.
    """
    f32 = jnp.float32
    adj2 = adj[0]
    n, c = x.shape
    l_latent = params["wproj"].shape[1]
    f_out = params["wf"].shape[1]

    f_pad = _round_up(f_out + 1, 128)      # lane-dense target/rhs/out; col f_out holds s
    f_col = f_out

    adj_bytes = jnp.dtype(adj_compute_dtype).itemsize
    itm_bytes = adj_bytes                  # target / rhs stored in the same dtype
    vmem_limit, budget = _vmem_plan()
    tm, tk, n_pad_r, n_pad_c = _plan_tiles(n, c, l_latent, f_pad,
                                           adj_bytes, itm_bytes, budget)
    num_i = n_pad_r // tm
    num_k = n_pad_c // tk

    # cast BEFORE padding (halves the pad copy); skip padding entirely if aligned
    adj_c = adj2.astype(adj_compute_dtype)
    if n_pad_r != n or n_pad_c != n:
        adj_p = jnp.pad(adj_c, ((0, n_pad_r - n), (0, n_pad_c - n)))
    else:
        adj_p = adj_c
    x_p = x.astype(f32)
    if n_pad_r != n:
        x_p = jnp.pad(x_p, ((0, n_pad_r - n), (0, 0)))

    # fused / padded weights (one-time layout plumbing)
    wf_p = jnp.pad(params["wf"].astype(f32), ((0, 0), (0, f_pad - f_out)))
    bf_p = jnp.pad(params["bf"].astype(f32), ((0, 0), (0, f_pad - f_out)))
    wcat = jnp.concatenate([wf_p, params["wproj"].astype(f32)], axis=1)   # (C, Fp+L)
    bcat = jnp.concatenate([bf_p, params["bproj"].astype(f32)], axis=1)   # (1, Fp+L)
    wpi1 = params["wpi1"].astype(f32)                                     # (L, C)
    bpi1 = params["bpi1"].astype(f32)                                     # (1, C)
    wpi2t = params["wpi2"].astype(f32).T                                  # (1, C)
    bpi2 = params["bpi2"].astype(f32).reshape((1,))                       # (1,)
    nrows = jnp.array([n], dtype=jnp.int32)

    smem = pl.BlockSpec(memory_space=pltpu.MemorySpace.SMEM)
    cparams = pltpu.CompilerParams(
        dimension_semantics=("parallel", "arbitrary"),
        vmem_limit_bytes=vmem_limit)

    # --- pass 1: q accumulation + MLPs -> target, rhs ------------------------------
    prep = pl.pallas_call(
        functools.partial(tmd_prep_kernel, tm=tm, f_pad=f_pad, f_col=f_col),
        grid=(num_i, num_k),
        out_shape=(
            jax.ShapeDtypeStruct((n_pad_r, f_pad), adj_compute_dtype),  # target
            jax.ShapeDtypeStruct((n_pad_r, f_pad), adj_compute_dtype),  # rhs
        ),
        in_specs=[
            smem, smem,                                                 # nrows, bpi2
            pl.BlockSpec((tm, tk), lambda i, k: (i, k)),                # adj block
            pl.BlockSpec((tm, c), lambda i, k: (i, 0)),                 # x row block
            pl.BlockSpec((c, f_pad + l_latent), lambda i, k: (0, 0)),   # wcat
            pl.BlockSpec((1, f_pad + l_latent), lambda i, k: (0, 0)),   # bcat
            pl.BlockSpec((l_latent, c), lambda i, k: (0, 0)),           # wpi1
            pl.BlockSpec((1, c), lambda i, k: (0, 0)),                  # bpi1
            pl.BlockSpec((1, c), lambda i, k: (0, 0)),                  # wpi2^T
        ],
        out_specs=(pl.BlockSpec((tm, f_pad), lambda i, k: (i, 0)),
                   pl.BlockSpec((tm, f_pad), lambda i, k: (i, 0))),
        scratch_shapes=[pltpu.VMEM((tm, 1), jnp.float32)],              # q accumulator
        compiler_params=cparams,
    )
    target, rhs = prep(nrows, bpi2, adj_p, x_p, wcat, bcat, wpi1, bpi1, wpi2t)

    # match rhs row count to the K padding of the apply pass (extra rows are zero)
    if n_pad_c > n_pad_r:
        rhs = jnp.pad(rhs, ((0, n_pad_c - n_pad_r), (0, 0)))
    elif n_pad_c < n_pad_r:
        rhs = rhs[:n_pad_c]

    # scalar folds hoisted to the wrapper: [1 - dt, dt / eps]
    dt = params["dt"].astype(f32).reshape(())
    coef = jnp.stack([1.0 - dt, dt / epsilon]).astype(f32)              # (2,)

    # --- pass 2: out = (1-dt)*target + (dt/eps) * (adj @ rhs) / d~ -----------------
    apply_call = pl.pallas_call(
        functools.partial(tmd_apply_kernel, f_col=f_col),
        grid=(num_i, num_k),
        out_shape=jax.ShapeDtypeStruct((n_pad_r, f_pad), f32),
        in_specs=[
            smem,                                                       # coef
            pl.BlockSpec((tm, tk), lambda i, k: (i, k)),                # adj block
            pl.BlockSpec((tk, f_pad), lambda i, k: (k, 0)),             # rhs K-block
            pl.BlockSpec((tm, f_pad), lambda i, k: (i, 0)),             # target row block
        ],
        out_specs=pl.BlockSpec((tm, f_pad), lambda i, k: (i, 0)),
        scratch_shapes=[pltpu.VMEM((tm, f_pad), jnp.float32)],          # acc across k
        compiler_params=cparams,
    )
    out = apply_call(coef, adj_p, rhs, target)
    return out[:n, :f_out]


def tmd_layer_ref(x, adj, params, *, epsilon=0.25):
    """Pure-JAX reference mirroring the torch code exactly (dense diag/K~/L)."""
    adj2 = adj[0]
    xp = x @ params["wproj"] + params["bproj"]
    h = jnp.maximum(xp @ params["wpi1"] + params["bpi1"], 0.0)
    pi = jax.nn.sigmoid(h @ params["wpi2"] + params["bpi2"])            # (N,1)
    q = adj2.sum(axis=1, keepdims=True)
    d_eps = jnp.diag((pi / q)[:, 0])
    k_tilde = adj2 @ d_eps
    d_tilde = k_tilde.sum(axis=1, keepdims=True) + 1e-5
    n = adj2.shape[0]
    L = (1.0 / epsilon) * (k_tilde / d_tilde) - jnp.eye(n)
    target = jnp.maximum(x @ params["wf"] + params["bf"], 0.0)
    return target + params["dt"][0, 0] * (L @ target)


def init_params(key, in_features, l_latent, out_features):
    ks = jax.random.split(key, 8)
    u = lambda k, shape, bound: jax.random.uniform(k, shape, jnp.float32, -bound, bound)
    params = {
        # proj_list: Linear(in_features -> L_latent)
        "wproj": u(ks[0], (in_features, l_latent), 1.0 / in_features ** 0.5),
        "bproj": u(ks[1], (1, l_latent), 1.0 / in_features ** 0.5),
        # pi_list: Linear(L_latent -> in_features), ReLU, Linear(in_features -> 1), Sigmoid
        "wpi1": u(ks[2], (l_latent, in_features), 1.0 / l_latent ** 0.5),
        "bpi1": u(ks[3], (1, in_features), 1.0 / l_latent ** 0.5),
        "wpi2": u(ks[4], (in_features, 1), 1.0 / in_features ** 0.5),
        "bpi2": u(ks[5], (1, 1), 1.0 / in_features ** 0.5),
        # f: Linear(in_features -> out_features)
        "wf": u(ks[6], (in_features, out_features), 1.0 / in_features ** 0.5),
        "bf": u(ks[7], (1, out_features), 1.0 / in_features ** 0.5),
        # dt parameter, initialized to 0.1 as in the torch module
        "dt": jnp.array([[0.1]], dtype=jnp.float32),
    }
    return params


if __name__ == "__main__":
    N = 16             # number of nodes
    IN_FEATURES = 32   # in_features
    L_LATENT = 8       # L_latent
    OUT_FEATURES = 32  # output width of f
    EPSILON = 0.25

    key = jax.random.PRNGKey(0)
    k_x, k_adj, k_p = jax.random.split(key, 3)

    x = jax.random.normal(k_x, (N, IN_FEATURES), dtype=jnp.float32)
    # positive adjacency so q (row sums) is nonzero; torch bmm layout (1, N, N)
    adj = jax.random.uniform(k_adj, (1, N, N), jnp.float32, 0.1, 1.0)
    params = init_params(k_p, IN_FEATURES, L_LATENT, OUT_FEATURES)

    ref = tmd_layer_ref(x, adj, params, epsilon=EPSILON)

    # torch-exact configuration (f32 adj / intermediates): tight tolerance
    out_f32 = tmd_layer_pallas(x, adj, params, epsilon=EPSILON,
                               adj_compute_dtype=jnp.float32)
    out_f32 = jax.block_until_ready(out_f32)
    assert out_f32.shape == (N, OUT_FEATURES)
    assert jnp.allclose(out_f32, ref, rtol=1e-4, atol=1e-4), \
        "Pallas kernel (f32) mismatch vs reference"

    # default performance configuration (bf16 adj / intermediates): loose tolerance
    out_bf16 = jax.block_until_ready(tmd_layer_pallas(x, adj, params, epsilon=EPSILON))
    assert out_bf16.shape == (N, OUT_FEATURES)
    assert jnp.allclose(out_bf16, ref, rtol=5e-2, atol=5e-2), \
        "Pallas kernel (bf16) mismatch vs reference"

    print("KERNEL_OK")
</pallas_src>

<mosaic_0001>
module attributes {stable_mosaic.version = 11 : i64} {
  func.func @tmd_prep_kernel(%arg0: i32, %arg1: i32, %arg2: memref<1xi32, #tpu.memory_space<smem>>, %arg3: memref<1xf32, #tpu.memory_space<smem>>, %arg4: memref<16x16xf32, #tpu.memory_space<vmem>>, %arg5: memref<16x32xf32, #tpu.memory_space<vmem>>, %arg6: memref<32x136xf32, #tpu.memory_space<vmem>>, %arg7: memref<1x136xf32, #tpu.memory_space<vmem>>, %arg8: memref<8x32xf32, #tpu.memory_space<vmem>>, %arg9: memref<1x32xf32, #tpu.memory_space<vmem>>, %arg10: memref<1x32xf32, #tpu.memory_space<vmem>>, %arg11: memref<16x128xf32, #tpu.memory_space<vmem>>, %arg12: memref<16x128xf32, #tpu.memory_space<vmem>>, %arg13: memref<16x1xf32, #tpu.memory_space<vmem>>) attributes {dimension_semantics = [#tpu.dimension_semantics<parallel>, #tpu.dimension_semantics<arbitrary>], iteration_bounds = array<i64: 1, 1>, scalar_prefetch = 0 : i64, scratch_operands = 1 : i64, tpu.core_type = #tpu.core_type<tc>, window_params = [{transform_indices = @transform_0, window_bounds = array<i64: 1>}, {transform_indices = @transform_1, window_bounds = array<i64: 1>}, {transform_indices = @transform_2, window_bounds = array<i64: 16, 16>}, {transform_indices = @transform_3, window_bounds = array<i64: 16, 32>}, {pipeline_mode = #tpu.pipeline_mode<synchronous>, transform_indices = @transform_4, window_bounds = array<i64: 32, 136>}, {pipeline_mode = #tpu.pipeline_mode<synchronous>, transform_indices = @transform_5, window_bounds = array<i64: 1, 136>}, {pipeline_mode = #tpu.pipeline_mode<synchronous>, transform_indices = @transform_6, window_bounds = array<i64: 8, 32>}, {pipeline_mode = #tpu.pipeline_mode<synchronous>, transform_indices = @transform_7, window_bounds = array<i64: 1, 32>}, {pipeline_mode = #tpu.pipeline_mode<synchronous>, transform_indices = @transform_8, window_bounds = array<i64: 1, 32>}, {transform_indices = @transform_9, window_bounds = array<i64: 16, 128>}, {transform_indices = @transform_10, window_bounds = array<i64: 16, 128>}]} {
    %c0_i32 = arith.constant 0 : i32
    %0 = arith.cmpi eq, %arg1, %c0_i32 : i32
    %1 = arith.extui %0 : i1 to i32
    %c0_i32_0 = arith.constant 0 : i32
    %2 = arith.cmpi ne, %1, %c0_i32_0 : i32
    scf.if %2 {
      %cst_8 = arith.constant 0.000000e+00 : f32
      %12 = vector.broadcast %cst_8 : f32 to vector<16x1xf32>
      %c0_9 = arith.constant 0 : index
      %c0_10 = arith.constant 0 : index
      %13 = vector.load %arg13[%c0_9, %c0_10] : memref<16x1xf32, #tpu.memory_space<vmem>>, vector<16x1xf32>
      tpu.vector_store %arg13[%c0_9, %c0_10], %12 {strides = array<i32>} : memref<16x1xf32, #tpu.memory_space<vmem>>, vector<16x1xf32>,
    } else {
    }
    %c0 = arith.constant 0 : index
    %c0_1 = arith.constant 0 : index
    %3 = vector.load %arg13[%c0, %c0_1] : memref<16x1xf32, #tpu.memory_space<vmem>>, vector<16x1xf32>
    %c0_2 = arith.constant 0 : index
    %c0_3 = arith.constant 0 : index
    %4 = vector.load %arg4[%c0_2, %c0_3] : memref<16x16xf32, #tpu.memory_space<vmem>>, vector<16x16xf32>
    %cst = arith.constant dense<0.000000e+00> : vector<16xf32>
    %5 = vector.multi_reduction <add>, %4, %cst [1] : vector<16x16xf32> to vector<16xf32>
    %6 = vector.shape_cast %5 : vector<16xf32> to vector<16x1xf32>
    %7 = arith.addf %3, %6 : vector<16x1xf32>
    %c0_4 = arith.constant 0 : index
    %c0_5 = arith.constant 0 : index
    %8 = vector.load %arg13[%c0_4, %c0_5] : memref<16x1xf32, #tpu.memory_space<vmem>>, vector<16x1xf32>
    tpu.vector_store %arg13[%c0_4, %c0_5], %7 {strides = array<i32>} : memref<16x1xf32, #tpu.memory_space<vmem>>, vector<16x1xf32>,
    %c0_i32_6 = arith.constant 0 : i32
    %9 = arith.cmpi eq, %arg1, %c0_i32_6 : i32
    %10 = arith.extui %9 : i1 to i32
    %c0_i32_7 = arith.constant 0 : i32
    %11 = arith.cmpi ne, %10, %c0_i32_7 : i32
    scf.if %11 {
      %c0_8 = arith.constant 0 : index
      %c0_9 = arith.constant 0 : index
      %12 = vector.load %arg5[%c0_8, %c0_9] : memref<16x32xf32, #tpu.memory_space<vmem>>, vector<16x32xf32>
      %c0_10 = arith.constant 0 : index
      %c0_11 = arith.constant 0 : index
      %13 = vector.load %arg6[%c0_10, %c0_11] : memref<32x136xf32, #tpu.memory_space<vmem>>, vector<32x136xf32>
      %cst_12 = arith.constant dense<0.000000e+00> : vector<16x136xf32>
      %14 = tpu.matmul %12, %13, %cst_12 {dimension_numbers = #tpu.dot_dimension_numbers<[1], [0], [0], [1], [0, 0, 1, 1], [], []>} : vector<16x32xf32>, vector<32x136xf32>, vector<16x136xf32> -> vector<16x136xf32>
      %c0_13 = arith.constant 0 : index
      %c0_14 = arith.constant 0 : index
      %15 = vector.load %arg7[%c0_13, %c0_14] : memref<1x136xf32, #tpu.memory_space<vmem>>, vector<1x136xf32>
      %16 = vector.broadcast %15 : vector<1x136xf32> to vector<16x136xf32>
      %17 = arith.addf %14, %16 : vector<16x136xf32>
      %18 = vector.extract_strided_slice %17 {offsets = [0, 0], sizes = [16, 128], strides = [1, 1]} : vector<16x136xf32> to vector<16x128xf32>
      %cst_15 = arith.constant 0.000000e+00 : f32
      %19 = vector.broadcast %cst_15 : f32 to vector<16x128xf32>
      %20 = arith.maximumf %18, %19 : vector<16x128xf32>
      %21 = vector.extract_strided_slice %17 {offsets = [0, 128], sizes = [16, 8], strides = [1, 1]} : vector<16x136xf32> to vector<16x8xf32>
      %c0_16 = arith.constant 0 : index
      %c0_17 = arith.constant 0 : index
      %22 = vector.load %arg8[%c0_16, %c0_17] : memref<8x32xf32, #tpu.memory_space<vmem>>, vector<8x32xf32>
      %cst_18 = arith.constant dense<0.000000e+00> : vector<16x32xf32>
      %23 = tpu.matmul %21, %22, %cst_18 {dimension_numbers = #tpu.dot_dimension_numbers<[1], [0], [0], [1], [0, 0, 1, 1], [], []>} : vector<16x8xf32>, vector<8x32xf32>, vector<16x32xf32> -> vector<16x32xf32>
      %c0_19 = arith.constant 0 : index
      %c0_20 = arith.constant 0 : index
      %24 = vector.load %arg9[%c0_19, %c0_20] : memref<1x32xf32, #tpu.memory_space<vmem>>, vector<1x32xf32>
      %25 = vector.broadcast %24 : vector<1x32xf32> to vector<16x32xf32>
      %26 = arith.addf %23, %25 : vector<16x32xf32>
      %cst_21 = arith.constant 0.000000e+00 : f32
      %27 = vector.broadcast %cst_21 : f32 to vector<16x32xf32>
      %28 = arith.maximumf %26, %27 : vector<16x32xf32>
      %c0_22 = arith.constant 0 : index
      %c0_23 = arith.constant 0 : index
      %29 = vector.load %arg10[%c0_22, %c0_23] : memref<1x32xf32, #tpu.memory_space<vmem>>, vector<1x32xf32>
      %30 = vector.broadcast %29 : vector<1x32xf32> to vector<16x32xf32>
      %31 = arith.mulf %28, %30 : vector<16x32xf32>
      %cst_24 = arith.constant dense<0.000000e+00> : vector<16xf32>
      %32 = vector.multi_reduction <add>, %31, %cst_24 [1] : vector<16x32xf32> to vector<16xf32>
      %33 = vector.shape_cast %32 : vector<16xf32> to vector<16x1xf32>
      %c0_25 = arith.constant 0 : index
      %34 = memref.load %arg3[%c0_25] : memref<1xf32, #tpu.memory_space<smem>>
      %35 = vector.broadcast %34 : f32 to vector<16x1xf32>
      %36 = arith.addf %33, %35 : vector<16x1xf32>
      %37 = arith.negf %36 : vector<16x1xf32>
      %38 = math.exp %37 : vector<16x1xf32>
      %cst_26 = arith.constant 1.000000e+00 : f32
      %39 = vector.broadcast %cst_26 : f32 to vector<16x1xf32>
      %40 = arith.addf %39, %38 : vector<16x1xf32>
      %41 = arith.divf %39, %40 : vector<16x1xf32>
      %c16_i32 = arith.constant 16 : i32
      %42 = arith.muli %arg0, %c16_i32 : i32
      %43 = tpu.iota {dimensions = array<i32: 0>} : vector<16x1xi32>
      %44 = vector.broadcast %42 : i32 to vector<16x1xi32>
      %45 = arith.addi %44, %43 : vector<16x1xi32>
      %c0_27 = arith.constant 0 : index
      %46 = memref.load %arg2[%c0_27] : memref<1xi32, #tpu.memory_space<smem>>
      %47 = vector.broadcast %46 : i32 to vector<16x1xi32>
      %48 = arith.cmpi slt, %45, %47 : vector<16x1xi32>
      %c0_28 = arith.constant 0 : index
      %c0_29 = arith.constant 0 : index
      %49 = vector.load %arg13[%c0_28, %c0_29] : memref<16x1xf32, #tpu.memory_space<vmem>>, vector<16x1xf32>
      %50 = arith.divf %41, %49 : vector<16x1xf32>
      %cst_30 = arith.constant 0.000000e+00 : f32
      %51 = vector.broadcast %cst_30 : f32 to vector<16x1xf32>
      %52 = arith.select %48, %50, %51 : vector<16x1xi1>, vector<16x1xf32>
      %53 = tpu.iota {dimensions = array<i32: 1>} : vector<16x128xi32>
      %c32_i32 = arith.constant 32 : i32
      %54 = vector.broadcast %c32_i32 : i32 to vector<16x128xi32>
      %55 = arith.cmpi eq, %53, %54 : vector<16x128xi32>
      %56 = vector.broadcast %52 : vector<16x1xf32> to vector<16x128xf32>
      %57 = arith.mulf %56, %20 : vector<16x128xf32>
      %58 = vector.shape_cast %52 : vector<16x1xf32> to vector<16x1xf32>
      %59 = vector.broadcast %58 : vector<16x1xf32> to vector<16x128xf32>
      %60 = arith.select %55, %59, %57 : vector<16x128xi1>, vector<16x128xf32>
      %c0_31 = arith.constant 0 : index
      %c0_32 = arith.constant 0 : index
      %61 = vector.load %arg11[%c0_31, %c0_32] : memref<16x128xf32, #tpu.memory_space<vmem>>, vector<16x128xf32>
      tpu.vector_store %arg11[%c0_31, %c0_32], %20 {strides = array<i32>} : memref<16x128xf32, #tpu.memory_space<vmem>>, vector<16x128xf32>,
      %c0_33 = arith.constant 0 : index
      %c0_34 = arith.constant 0 : index
      %62 = vector.load %arg12[%c0_33, %c0_34] : memref<16x128xf32, #tpu.memory_space<vmem>>, vector<16x128xf32>
      tpu.vector_store %arg12[%c0_33, %c0_34], %60 {strides = array<i32>} : memref<16x128xf32, #tpu.memory_space<vmem>>, vector<16x128xf32>,
    } else {
    }
    return
  }
  func.func @transform_0(%arg0: i32, %arg1: i32) -> i32 {
    %c0_i32 = arith.constant 0 : i32
    %c0_i32_0 = arith.constant 0 : i32
    return %c0_i32 : i32
  }
  func.func @transform_1(%arg0: i32, %arg1: i32) -> i32 {
    %c0_i32 = arith.constant 0 : i32
    %c0_i32_0 = arith.constant 0 : i32
    return %c0_i32 : i32
  }
  func.func @transform_2(%arg0: i32, %arg1: i32) -> (i32, i32) {
    %c0_i32 = arith.constant 0 : i32
    return %arg0, %arg1 : i32, i32
  }
  func.func @transform_3(%arg0: i32, %arg1: i32) -> (i32, i32) {
    %c0_i32 = arith.constant 0 : i32
    %c0_i32_0 = arith.constant 0 : i32
    return %arg0, %c0_i32 : i32, i32
  }
  func.func @transform_4(%arg0: i32, %arg1: i32) -> (i32, i32) {
    %c0_i32 = arith.constant 0 : i32
    %c0_i32_0 = arith.constant 0 : i32
    %c0_i32_1 = arith.constant 0 : i32
    return %c0_i32, %c0_i32_0 : i32, i32
  }
  func.func @transform_5(%arg0: i32, %arg1: i32) -> (i32, i32) {
    %c0_i32 = arith.constant 0 : i32
    %c0_i32_0 = arith.constant 0 : i32
    %c0_i32_1 = arith.constant 0 : i32
    return %c0_i32, %c0_i32_0 : i32, i32
  }
  func.func @transform_6(%arg0: i32, %arg1: i32) -> (i32, i32) {
    %c0_i32 = arith.constant 0 : i32
    %c0_i32_0 = arith.constant 0 : i32
    %c0_i32_1 = arith.constant 0 : i32
    return %c0_i32, %c0_i32_0 : i32, i32
  }
  func.func @transform_7(%arg0: i32, %arg1: i32) -> (i32, i32) {
    %c0_i32 = arith.constant 0 : i32
    %c0_i32_0 = arith.constant 0 : i32
    %c0_i32_1 = arith.constant 0 : i32
    return %c0_i32, %c0_i32_0 : i32, i32
  }
  func.func @transform_8(%arg0: i32, %arg1: i32) -> (i32, i32) {
    %c0_i32 = arith.constant 0 : i32
    %c0_i32_0 = arith.constant 0 : i32
    %c0_i32_1 = arith.constant 0 : i32
    return %c0_i32, %c0_i32_0 : i32, i32
  }
  func.func @transform_9(%arg0: i32, %arg1: i32) -> (i32, i32) {
    %c0_i32 = arith.constant 0 : i32
    %c0_i32_0 = arith.constant 0 : i32
    return %arg0, %c0_i32 : i32, i32
  }
  func.func @transform_10(%arg0: i32, %arg1: i32) -> (i32, i32) {
    %c0_i32 = arith.constant 0 : i32
    %c0_i32_0 = arith.constant 0 : i32
    return %arg0, %c0_i32 : i32, i32
  }
}

</mosaic_0001>

<llo_original>
// kernel: tpu_custom_call.1
$region0: #{tpu_custom_call.1}
  #allocation0 [shape = 'u32[]', space=smem, size = 0x4, offset = 0x4, fixed_abs, tag = 'smem constant byte address 0x4 - core index']
  #allocation1 [shape = 'u32[72,128]{1,0:T(1,128)}', space=vmem, size = 0x9000, scoped, tag = 'internal scratch']
  #allocation2 [shape = 'f32[16,1]{1,0:T(8,128)}', space=vmem, size = 0x2000, scoped, tag = 'scratch operand']
  #allocation3 [shape = 's32[1]{0:T(128)S(6)}', space=smem, size = 0x200, scoped, tag = 'scoped memory for tpu_custom_call.1']
  #allocation4 [shape = 'f32[1]{0:T(128)S(6)}', space=smem, size = 0x200, scoped, tag = 'scoped memory for tpu_custom_call.1']
  %s0 = inlined_call_operand.<no memory space> [shape: s32[1], index: 0, kind: input, shape index: {}]
  %s1 = inlined_call_operand.<no memory space> [shape: f32[1], index: 1, kind: input, shape index: {}]
  %s2 = inlined_call_operand.hbm [shape: f32[16,16], index: 2, kind: input, shape index: {}]
  %s3 = inlined_call_operand.hbm [shape: f32[16,32], index: 3, kind: input, shape index: {}]
  %s4 = inlined_call_operand.hbm [shape: f32[32,136], index: 4, kind: input, shape index: {}]
  %s5 = inlined_call_operand.vmem [shape: f32[1,136], index: 5, kind: input, shape index: {}]
  %s6 = inlined_call_operand.hbm [shape: f32[8,32], index: 6, kind: input, shape index: {}]
  %s7 = inlined_call_operand.vmem [shape: f32[1,32], index: 7, kind: input, shape index: {}]
  %s8 = inlined_call_operand.vmem [shape: f32[1,32], index: 8, kind: input, shape index: {}]
  %s9 = inlined_call_operand.hbm [shape: f32[16,128], index: 9, kind: output, shape index: {0}]
  %s10 = inlined_call_operand.hbm [shape: f32[16,128], index: 10, kind: output, shape index: {1}]
  %11 = xla_tuple %s9, %s10
  %s12 = sld [smem:[#allocation0]]
  $region78: #{tpu_custom_call.1} parent=0
    _
  %s14 = ssub.s32 1, %s12
  %s15 = scalar_select 0, %s14, %s12
  %16 = sst [smem:[#allocation3]] %s0
  %17 = sst [smem:[#allocation4]] %s1
  $region1: #{tpu_custom_call.1} parent=0
    #allocation5 [shape = 'u8[8192]{0}', space=vmem, size = 0x2000, scoped, tag = 'input window, operand 2, single buffered']
    #allocation6 [shape = 's32[1]{0}', space=sflag, size = 0x4, scoped, tag = 'scoped memory for tpu_custom_call.1']
    #allocation7 [shape = 's32[1]{0}', space=sflag, size = 0x4, scoped, tag = 'scoped memory for tpu_custom_call.1']
    #allocation8 [shape = 'u8[8192]{0}', space=vmem, size = 0x2000, scoped, tag = 'input window, operand 3, single buffered']
    #allocation9 [shape = 's32[1]{0}', space=sflag, size = 0x4, scoped, tag = 'scoped memory for tpu_custom_call.1']
    #allocation10 [shape = 'u8[32768]{0}', space=vmem, size = 0x8000, scoped, tag = 'input window, operand 4, single buffered']
    #allocation11 [shape = 'u8[4096]{0}', space=vmem, size = 0x1000, scoped, tag = 'input window, operand 6, single buffered']
    #allocation12 [shape = 's32[1]{0}', space=sflag, size = 0x4, scoped, tag = 'scoped memory for tpu_custom_call.1']
    #allocation13 [shape = 'u8[8192]{0}', space=vmem, size = 0x2000, scoped, tag = 'output window, operand 0, single buffered']
    #allocation14 [shape = 'u8[8192]{0}', space=vmem, size = 0x2000, scoped, tag = 'output window, operand 1, single buffered']
    #allocation15 [shape = 's32[1]{0}', space=sflag, size = 0x4, scoped, tag = 'scoped memory for tpu_custom_call.1']
    %18 = vsyncpa [#allocation6], 0
    %19 = vsyncpa [#allocation9], 0
    %20 = vsyncpa [#allocation12], 0
    %21 = vsyncpa [#allocation7], 0
    %22 = vsyncpa [#allocation15], 0
    // Predicated region
    $region2: #{tpu_custom_call.1} parent=1 // pred_check
      _
    $region3: #{tpu_custom_call.1} parent=1 // pred_check_branch
      %24 = sbr.rel (0) target = $region5
    $region4: #{tpu_custom_call.1} parent=1 // pred_region
      _
    $region5: #{tpu_custom_call.1} parent=1 // pred_fallthru
      _
    // Predicated region
    $region6: #{tpu_custom_call.1} parent=1 // pred_check
      _
    $region7: #{tpu_custom_call.1} parent=1 // pred_check_branch
      %26 = sbr.rel (0) target = $region9
    $region8: #{tpu_custom_call.1} parent=1 // pred_region
      _
    $region9: #{tpu_custom_call.1} parent=1 // pred_fallthru
      _
    // Predicated region
    $region10: #{tpu_custom_call.1} parent=1 // pred_check
      _
    $region11: #{tpu_custom_call.1} parent=1 // pred_check_branch
      %28 = sbr.rel (0) target = $region13
    $region12: #{tpu_custom_call.1} parent=1 // pred_region
      %30 = vsyncadd [#allocation6], 0
      %s31 = sshll.u32 %s2, 4
      %s32 = int_to_ptr.hbm [resolvable:$true] %s31
      %s33 = sshll.u32 [#allocation5], 4
      %s34 = int_to_ptr.vmem [resolvable:$true] %s33
      %39 = dma.hbm_to_vmem [thread:$0]  %s32, 256, %s34, [#allocation6], 128, 128, 8
    $region13: #{tpu_custom_call.1} parent=1 // pred_fallthru
      _
    // Predicated region
    $region14: #{tpu_custom_call.1} parent=1 // pred_check
      _
    $region15: #{tpu_custom_call.1} parent=1 // pred_check_branch
      %41 = sbr.rel (0) target = $region17
    $region16: #{tpu_custom_call.1} parent=1 // pred_region
      %43 = vsyncadd [#allocation9], 0
      %s44 = sshll.u32 %s3, 4
      %s45 = int_to_ptr.hbm [resolvable:$true] %s44
      %s46 = sshll.u32 [#allocation8], 4
      %s47 = int_to_ptr.vmem [resolvable:$true] %s46
      %52 = dma.hbm_to_vmem [thread:$0]  %s45, 256, %s47, [#allocation9], 128, 128, 8
    $region17: #{tpu_custom_call.1} parent=1 // pred_fallthru
      _
    // Predicated region
    $region18: #{tpu_custom_call.1} parent=1 // pred_check
      _
    $region19: #{tpu_custom_call.1} parent=1 // pred_check_branch
      %54 = sbr.rel (0) target = $region21
    $region20: #{tpu_custom_call.1} parent=1 // pred_region
      %56 = vsyncadd [#allocation9], 0
      %s57 = sshll.u32 %s4, 4
      %s58 = int_to_ptr.hbm [resolvable:$true] %s57
      %s59 = sshll.u32 [#allocation10], 4
      %s60 = int_to_ptr.vmem [resolvable:$true] %s59
      %65 = dma.hbm_to_vmem [thread:$0]  %s58, 1024, %s60, [#allocation9], 256, 256, 16
    $region21: #{tpu_custom_call.1} parent=1 // pred_fallthru
      _
    // Predicated region
    $region22: #{tpu_custom_call.1} parent=1 // pred_check
      _
    $region23: #{tpu_custom_call.1} parent=1 // pred_check_branch
      %67 = sbr.rel (0) target = $region25
    $region24: #{tpu_custom_call.1} parent=1 // pred_region
      _
    $region25: #{tpu_custom_call.1} parent=1 // pred_fallthru
      _
    // Predicated region
    $region26: #{tpu_custom_call.1} parent=1 // pred_check
      _
    $region27: #{tpu_custom_call.1} parent=1 // pred_check_branch
      %69 = sbr.rel (0) target = $region29
    $region28: #{tpu_custom_call.1} parent=1 // pred_region
      %71 = vsyncadd [#allocation12], 0
      %s73 = sshll.u32 %s6, 4
      %s74 = int_to_ptr.hbm [resolvable:$true] %s73
      %s75 = sshll.u32 [#allocation11], 4
      %s76 = int_to_ptr.vmem [resolvable:$true] %s75
      %78 = dma.hbm_to_vmem [thread:$0]  %s74, 128, %s76, [#allocation12]
    $region29: #{tpu_custom_call.1} parent=1 // pred_fallthru
      _
    // Predicated region
    $region30: #{tpu_custom_call.1} parent=1 // pred_check
      _
    $region31: #{tpu_custom_call.1} parent=1 // pred_check_branch
      %80 = sbr.rel (0) target = $region33
    $region32: #{tpu_custom_call.1} parent=1 // pred_region
      _
    $region33: #{tpu_custom_call.1} parent=1 // pred_fallthru
      _
    // Predicated region
    $region34: #{tpu_custom_call.1} parent=1 // pred_check
      _
    $region35: #{tpu_custom_call.1} parent=1 // pred_check_branch
      %82 = sbr.rel (0) target = $region37
    $region36: #{tpu_custom_call.1} parent=1 // pred_region
      _
    $region37: #{tpu_custom_call.1} parent=1 // pred_fallthru
      _
    // Predicated region
    $region38: #{tpu_custom_call.1} parent=1 // pred_check
      _
    $region39: #{tpu_custom_call.1} parent=1 // pred_check_branch
      %84 = sbr.rel (0) target = $region41
    $region40: #{tpu_custom_call.1} parent=1 // pred_region
      %86 = dma.done [#allocation6], 256
    $region41: #{tpu_custom_call.1} parent=1 // pred_fallthru
      _
    // Predicated region
    $region42: #{tpu_custom_call.1} parent=1 // pred_check
      _
    $region43: #{tpu_custom_call.1} parent=1 // pred_check_branch
      %88 = sbr.rel (0) target = $region45
    $region44: #{tpu_custom_call.1} parent=1 // pred_region
      %90 = dma.done [#allocation9], 256
    $region45: #{tpu_custom_call.1} parent=1 // pred_fallthru
      _
    // Predicated region
    $region46: #{tpu_custom_call.1} parent=1 // pred_check
      _
    $region47: #{tpu_custom_call.1} parent=1 // pred_check_branch
      %92 = sbr.rel (0) target = $region49
    $region48: #{tpu_custom_call.1} parent=1 // pred_region
      %94 = dma.done [#allocation9], 1024
    $region49: #{tpu_custom_call.1} parent=1 // pred_fallthru
      _
    // Predicated region
    $region50: #{tpu_custom_call.1} parent=1 // pred_check
      _
    $region51: #{tpu_custom_call.1} parent=1 // pred_check_branch
      %96 = sbr.rel (0) target = $region53
    $region52: #{tpu_custom_call.1} parent=1 // pred_region
      %98 = dma.done [#allocation12], 128
    $region53: #{tpu_custom_call.1} parent=1 // pred_fallthru
      _
    %p99 = scmp.eq.s32.totalorder 0, 0
    // Predicated region
    $region54: #{tpu_custom_call.1} parent=1 // pred_check
      %p100 = pneg %p99
    $region55: #{tpu_custom_call.1} parent=1 // pred_check_branch
      %102 = sbr.rel (%p100) target = $region57
    $region56: #{tpu_custom_call.1} parent=1 // pred_region
      %vm103 = vcmask 7168
      %104 = vst.msk [vmem:[#allocation2] sm:$0xff] %vm103, 0.0
      %105 = vst.msk [vmem:[#allocation2 + $0x8] sm:$0xff] %vm103, 0.0
    $region57: #{tpu_custom_call.1} parent=1 // pred_fallthru
      _
    %v106 = vld [vmem:[#allocation2] sm:$0xff]
    %v107 = vld [vmem:[#allocation2 + $0x8] sm:$0xff]
    %v108 = vld [vmem:[#allocation5] sm:$0xff]
    %v109 = vld [vmem:[#allocation5 + $0x8] sm:$0xff]
    %vm110 = vcmask 130048
    %v111 = vsel %vm110, %v108, 0.0
    %112 = vadd.xlane.f32.xlu0 %v111
    %v113 = vpop.xlane.xlu0 %112
    %v114 = vsel %vm110, %v109, 0.0
    %115 = vadd.xlane.f32.xlu0 %v114
    %v116 = vpop.xlane.xlu0 %115
    %v117 = vadd.f32 %v106, %v113
    %v118 = vadd.f32 %v107, %v116
    %vm119 = vcmask 7168
    %120 = vst.msk [vmem:[#allocation2] sm:$0xff] %vm119, %v117
    %121 = vst.msk [vmem:[#allocation2 + $0x8] sm:$0xff] %vm119, %v118
    // Predicated region
    $region58: #{tpu_custom_call.1} parent=1 // pred_check
      %p122 = pneg %p99
    $region59: #{tpu_custom_call.1} parent=1 // pred_check_branch
      %124 = sbr.rel (%p122) target = $region61
    $region60: #{tpu_custom_call.1} parent=1 // pred_region
      %v125 = vld [vmem:[#allocation8] sm:$0xff]
      %v126 = vld [vmem:[#allocation8 + $0x8] sm:$0xff]
      %v127 = vld [vmem:[#allocation10] sm:$0xff]
      %v128 = vld [vmem:[#allocation10 + $0x8] sm:$0xff]
      %v129 = vld [vmem:[#allocation10 + $0x10] sm:$0xff]
      %v130 = vld [vmem:[#allocation10 + $0x18] sm:$0xff]
      %v131 = vld [vmem:[#allocation10 + $0x20] sm:$0xff]
      %v132 = vld [vmem:[#allocation10 + $0x28] sm:$0xff]
      %v133 = vld [vmem:[#allocation10 + $0x30] sm:$0xff]
      %v134 = vld [vmem:[#allocation10 + $0x38] sm:$0xff]
      %v135 = vld [vmem:[%s5] sm:$0x3]
      %v137 = vperm.slane %v135, 0
      %v138 = vperm.slane %v135, 1
      %vm141 = vcmask 261120
      %v143 = vsel %vm141, %v125, 0
      %v146 = vsel %vm141, %v126, 0
      %148 = vmatpush.msra.mxu0 0.0
      %149 = vmatpush.msra.mxu0 0.0
      %150 = vmatpush.msra.mxu0 0.0
      %151 = vmatpush.msra.mxu0 0.0
      %152 = vmatpush.msra.mxu0 0.0
      %153 = vmatpush.msra.mxu0 0.0
      %154 = vmatpush.msra.mxu0 0.0
      %155 = vmatpush.msra.mxu0 0.0
      %156 = vmatpush.msra.mxu0 0.0
      %157 = vmatpush.msra.mxu0 0.0
      %158 = vmatpush.msra.mxu0 0.0
      %159 = vmatpush.msra.mxu0 0.0
      %160 = vmatpush.msra.mxu0 %v133
      %161 = vmatpush.msra.mxu0 %v131
      %162 = vmatpush.msra.mxu0 %v129
      %163 = vmatpush.msra.mxu0 %v127
      %164 = vmatmul.f32.gmra.mxu0 %v143
      %v165 = vpop.f32.mrf.mxu0
      %v166 = vadd.f32 %v137, %v165
      %167 = vmatmul.f32.gmra.mxu0 %v146
      %v168 = vpop.f32.mrf.mxu0
      %v169 = vadd.f32 %v137, %v168
      %170 = vdwg.mxu0
      %171 = vmatpush.msra.mxu0 0.0
      %172 = vmatpush.msra.mxu0 0.0
      %173 = vmatpush.msra.mxu0 0.0
      %174 = vmatpush.msra.mxu0 0.0
      %175 = vmatpush.msra.mxu0 0.0
      %176 = vmatpush.msra.mxu0 0.0
      %177 = vmatpush.msra.mxu0 0.0
      %178 = vmatpush.msra.mxu0 0.0
      %179 = vmatpush.msra.mxu0 0.0
      %180 = vmatpush.msra.mxu0 0.0
      %181 = vmatpush.msra.mxu0 0.0
      %182 = vmatpush.msra.mxu0 0.0
      %183 = vmatpush.msra.mxu0 %v134
      %184 = vmatpush.msra.mxu0 %v132
      %185 = vmatpush.msra.mxu0 %v130
      %186 = vmatpush.msra.mxu0 %v128
      %187 = vmatmul.f32.gmra.mxu0 %v143
      %v188 = vpop.f32.mrf.mxu0
      %v189 = vadd.f32 %v138, %v188
      %190 = vmatmul.f32.gmra.mxu0 %v146
      %v191 = vpop.f32.mrf.mxu0
      %v192 = vadd.f32 %v138, %v191
      %193 = vdwg.mxu0
      %v194 = vmax.f32 %v166, 0.0
      %v195 = vmax.f32 %v169, 0.0
      %v196 = vld [vmem:[#allocation11] sm:$0xff]
      %v197 = vld [vmem:[%s7] sm:$0x1]
      %v199 = vperm.slane %v197, 0
      %vm201 = vcmask 64512
      %v203 = vsel %vm201, %v189, 0
      %v206 = vsel %vm201, %v192, 0
      %208 = vmatpush.msra.mxu0 0.0
      %209 = vmatpush.msra.mxu0 0.0
      %210 = vmatpush.msra.mxu0 0.0
      %211 = vmatpush.msra.mxu0 0.0
      %212 = vmatpush.msra.mxu0 0.0
      %213 = vmatpush.msra.mxu0 0.0
      %214 = vmatpush.msra.mxu0 0.0
      %215 = vmatpush.msra.mxu0 0.0
      %216 = vmatpush.msra.mxu0 0.0
      %217 = vmatpush.msra.mxu0 0.0
      %218 = vmatpush.msra.mxu0 0.0
      %219 = vmatpush.msra.mxu0 0.0
      %220 = vmatpush.msra.mxu0 0.0
      %221 = vmatpush.msra.mxu0 0.0
      %222 = vmatpush.msra.mxu0 0.0
      %223 = vmatpush.msra.mxu0 %v196
      %224 = vmatmul.f32.gmra.mxu0 %v203
      %v225 = vpop.f32.mrf.mxu0
      %v226 = vadd.f32 %v199, %v225
      %227 = vmatmul.f32.gmra.mxu0 %v206
      %v228 = vpop.f32.mrf.mxu0
      %v229 = vadd.f32 %v199, %v228
      %230 = vdwg.mxu0
      %v231 = vmax.f32 %v226, 0.0
      %v232 = vmax.f32 %v229, 0.0
      %v233 = vld [vmem:[%s8] sm:$0x1]
      %v235 = vperm.slane %v233, 0
      %v237 = vmul.f32 %v231, %v235
      %v238 = vmul.f32 %v232, %v235
      %v239 = vsel %vm141, %v237, 0.0
      %240 = vadd.xlane.f32.xlu0 %v239
      %v241 = vpop.xlane.xlu0 %240
      %v242 = vsel %vm141, %v238, 0.0
      %243 = vadd.xlane.f32.xlu0 %v242
      %v244 = vpop.xlane.xlu0 %243
      %s245 = sld [smem:[#allocation4]]
      %v246 = vstv %s245
      %v247 = vadd.f32 %v241, %v246
      %v248 = vadd.f32 %v244, %v246
      %v249 = vxor.u32 %v247, 2147483648
      %v250 = vxor.u32 %v248, 2147483648
      %v251 = vmul.f32 %v249, 1.442695
      %v252 = vpow.pop %v251
      %v253 = vmul.f32 %v250, 1.442695
      %v254 = vpow.pop %v253
      %v255 = vadd.f32 %v252, 1.0
      %v256 = vadd.f32 %v254, 1.0
      %v257 = vrcp.pop %v255
      %v258 = vmul.f32 %v255, %v257
      %v259 = vsub.f32 1.0, %v258
      %v260 = vmul.f32 %v257, %v259
      %v261 = vadd.f32 %v257, %v260
      %vm262 = vweird.f32 %v255
      %vm263 = vweird.f32 %v257
      %vm264 = vmor %vm262, %vm263
      %v265 = vsel %vm264, %v257, %v261
      %v266 = vand.u32 2147483647, %v255
      %vm267 = vcmp.eq.f32.partialorder %v266, 8.507059e+37
      %v268 = vand.u32 %v255, 2147483648
      %v269 = vor.u32 1.1754944e-38, %v268
      %v270 = vsel %vm267, %v269, %v265
      %v271 = vmul.f32 1.0, %v270
      %v272 = vrcp.pop %v256
      %v273 = vmul.f32 %v256, %v272
      %v274 = vsub.f32 1.0, %v273
      %v275 = vmul.f32 %v272, %v274
      %v276 = vadd.f32 %v272, %v275
      %vm277 = vweird.f32 %v256
      %vm278 = vweird.f32 %v272
      %vm279 = vmor %vm277, %vm278
      %v280 = vsel %vm279, %v272, %v276
      %v281 = vand.u32 2147483647, %v256
      %vm282 = vcmp.eq.f32.partialorder %v281, 8.507059e+37
      %v283 = vand.u32 %v256, 2147483648
      %v284 = vor.u32 1.1754944e-38, %v283
      %v285 = vsel %vm282, %v284, %v280
      %v286 = vmul.f32 1.0, %v285
      %s287 = smul.u32 0, 16
      %v288 = vlaneseq
      %v289 = vshrl.u32 %v288, 7
      %v290 = vadd.s32 %v289, 8
      %v291 = vstv %s287
      %v292 = vadd.s32 %v291, %v289
      %v293 = vadd.s32 %v291, %v290
      %s294 = sld [smem:[#allocation3]]
      %v295 = vstv %s294
      %vm296 = vcmp.lt.s32.totalorder %v292, %v295
      %vm297 = vcmp.lt.s32.totalorder %v293, %v295
      %v298 = vld [vmem:[#allocation2] sm:$0xff]
      %v299 = vld [vmem:[#allocation2 + $0x8] sm:$0xff]
      %v300 = vrcp.pop %v298
      %v301 = vmul.f32 %v298, %v300
      %v302 = vsub.f32 1.0, %v301
      %v303 = vmul.f32 %v300, %v302
      %v304 = vadd.f32 %v300, %v303
      %vm305 = vweird.f32 %v298
      %vm306 = vweird.f32 %v300
      %vm307 = vmor %vm305, %vm306
      %v308 = vsel %vm307, %v300, %v304
      %v309 = vand.u32 2147483647, %v298
      %vm310 = vcmp.eq.f32.partialorder %v309, 8.507059e+37
      %v311 = vand.u32 %v298, 2147483648
      %v312 = vor.u32 1.1754944e-38, %v311
      %v313 = vsel %vm310, %v312, %v308
      %v314 = vmul.f32 %v271, %v313
      %v315 = vrcp.pop %v299
      %v316 = vmul.f32 %v299, %v315
      %v317 = vsub.f32 1.0, %v316
      %v318 = vmul.f32 %v315, %v317
      %v319 = vadd.f32 %v315, %v318
      %vm320 = vweird.f32 %v299
      %vm321 = vweird.f32 %v315
      %vm322 = vmor %vm320, %vm321
      %v323 = vsel %vm322, %v315, %v319
      %v324 = vand.u32 2147483647, %v299
      %vm325 = vcmp.eq.f32.partialorder %v324, 8.507059e+37
      %v326 = vand.u32 %v299, 2147483648
      %v327 = vor.u32 1.1754944e-38, %v326
      %v328 = vsel %vm325, %v327, %v323
      %v329 = vmul.f32 %v286, %v328
      %v330 = vsel %vm296, %v314, 0.0
      %v331 = vsel %vm297, %v329, 0.0
      %v332 = vlaneseq
      %v333 = vand.u32 %v332, 127
      %vm334 = vcmp.eq.s32.totalorder %v333, 32
      %336 = vset.pattern.permute.xlu0 0
      %337 = vperm.xlu0 %336, %v330
      %v338 = vpop.permute.xlu0 %337
      %341 = vset.pattern.permute.xlu0 0
      %342 = vperm.xlu0 %341, %v331
      %v343 = vpop.permute.xlu0 %342
      %v345 = vmul.f32 %v338, %v194
      %v346 = vmul.f32 %v343, %v195
      %v347 = vsel %vm334, %v338, %v345
      %v348 = vsel %vm334, %v343, %v346
      %349 = vst [vmem:[#allocation13] sm:$0xff] %v194
      %350 = vst [vmem:[#allocation13 + $0x8] sm:$0xff] %v195
      %351 = vst [vmem:[#allocation14] sm:$0xff] %v347
      %352 = vst [vmem:[#allocation14 + $0x8] sm:$0xff] %v348
    $region61: #{tpu_custom_call.1} parent=1 // pred_fallthru
      _
    // Predicated region
    $region62: #{tpu_custom_call.1} parent=1 // pred_check
      _
    $region63: #{tpu_custom_call.1} parent=1 // pred_check_branch
      %354 = sbr.rel (0) target = $region65
    $region64: #{tpu_custom_call.1} parent=1 // pred_region
      %356 = vsyncadd [#allocation7], 0
      %s357 = sshll.u32 [#allocation13], 4
      %s358 = int_to_ptr.vmem [resolvable:$true] %s357
      %s359 = sshll.u32 %s9, 4
      %s360 = int_to_ptr.hbm [resolvable:$true] %s359
      %365 = dma.vmem_to_hbm [thread:$0]  %s358, 256, %s360, [#allocation7], 128, 128, 8
    $region65: #{tpu_custom_call.1} parent=1 // pred_fallthru
      _
    // Predicated region
    $region66: #{tpu_custom_call.1} parent=1 // pred_check
      _
    $region67: #{tpu_custom_call.1} parent=1 // pred_check_branch
      %367 = sbr.rel (0) target = $region69
    $region68: #{tpu_custom_call.1} parent=1 // pred_region
      %369 = vsyncadd [#allocation15], 0
      %s370 = sshll.u32 [#allocation14], 4
      %s371 = int_to_ptr.vmem [resolvable:$true] %s370
      %s372 = sshll.u32 %s10, 4
      %s373 = int_to_ptr.hbm [resolvable:$true] %s372
      %378 = dma.vmem_to_hbm [thread:$0]  %s371, 256, %s373, [#allocation15], 128, 128, 8
    $region69: #{tpu_custom_call.1} parent=1 // pred_fallthru
      _
    // Predicated region
    $region70: #{tpu_custom_call.1} parent=1 // pred_check
      _
    $region71: #{tpu_custom_call.1} parent=1 // pred_check_branch
      %380 = sbr.rel (0) target = $region73
    $region72: #{tpu_custom_call.1} parent=1 // pred_region
      %382 = dma.done [#allocation7], 256
    $region73: #{tpu_custom_call.1} parent=1 // pred_fallthru
      _
    // Predicated region
    $region74: #{tpu_custom_call.1} parent=1 // pred_check
      _
    $region75: #{tpu_custom_call.1} parent=1 // pred_check_branch
      %384 = sbr.rel (0) target = $region77
    $region76: #{tpu_custom_call.1} parent=1 // pred_region
      %386 = dma.done [#allocation15], 256
    $region77: #{tpu_custom_call.1} parent=1 // pred_fallthru
      _
    %387 = vsyncpa [#allocation6], 1
    %388 = vsyncpa [#allocation9], 1
    %389 = vsyncpa [#allocation12], 1
    %390 = vsyncpa [#allocation7], 1
    %391 = vsyncpa [#allocation15], 1

</llo_original>
